<compile_context>
chip_gen: v7x
topology: tpu7x:2x2x1
jax: 0.10.0
libtpu: 0.0.40
codegen_flags: <defaults>
</compile_context>

<pallas_src>
import jax
import jax.numpy as jnp
from jax.experimental import pallas as pl
from jax.experimental.pallas import tpu as pltpu


def _round_up(a, m):
    return ((a + m - 1) // m) * m


def encoder_kernel(x_ref, w1_ref, b1_ref, wh_ref, bh_ref, out_ref):
    # x tile: (TB, in_feats) in the matmul dtype (bf16 by default);
    # weights are whole-array VMEM-resident blocks.
    x = x_ref[...]

    # hidden = relu(x @ W1 + b1): bf16 MXU matmul, f32 accumulate, f32 epilogue.
    h = jnp.dot(x, w1_ref[...], preferred_element_type=jnp.float32)
    h = jnp.maximum(h + b1_ref[...], 0.0)            # (TB, H_pad) + (1, H_pad)

    # Fused heads: [mean | log_var | zero-pad] = h @ W_heads + b_heads.
    # Cast only the MXU operand to bf16; accumulation / bias add stay f32.
    y = jnp.dot(h.astype(wh_ref.dtype), wh_ref[...],
                preferred_element_type=jnp.float32)
    out_ref[...] = (y + bh_ref[...]).astype(out_ref.dtype)


def encoder_forward(x, w1, b1, wmu, bmu, wvar, bvar, *,
                    block_b=512,
                    matmul_dtype=jnp.bfloat16,
                    out_dtype=jnp.float32):
    """Returns (mean, log_var) matching the PyTorch Encoder.forward.

    Weights are expected pre-transposed to (in, out); biases are (1, out).
    """
    B, in_feats = x.shape
    H = w1.shape[1]
    L = wmu.shape[1]
    two_l = 2 * L

    # ---- Fuse the two heads; pad lanes (out) and hidden (contraction) -------
    out_w = _round_up(two_l, 128)          # lane-dense fused output width
    h_pad = _round_up(H, 128)              # lane-dense hidden activations

    w1_p = jnp.pad(w1, ((0, 0), (0, h_pad - H)))                 # (in, H_pad)
    b1_p = jnp.pad(b1, ((0, 0), (0, h_pad - H)))                 # (1,  H_pad)

    w_heads = jnp.concatenate([wmu, wvar], axis=1)               # (H, 2L)
    b_heads = jnp.concatenate([bmu, bvar], axis=1)               # (1, 2L)
    w_heads = jnp.pad(w_heads, ((0, h_pad - H), (0, out_w - two_l)))
    b_heads = jnp.pad(b_heads, ((0, 0), (0, out_w - two_l)))

    # ---- Batch tiling -------------------------------------------------------
    # Large tiles amortize the ~0.35 us per-step cost, but keep >= 2 grid steps
    # (when B allows) so v7x's second TensorCore gets work via the parallel axis.
    tb_cap = _round_up(pl.cdiv(B, 2), 8)
    tb = max(8, min(_round_up(min(block_b, B), 8), tb_cap))
    b_pad = _round_up(B, tb)
    if b_pad != B:
        x = jnp.pad(x, ((0, b_pad - B), (0, 0)))
    grid = (b_pad // tb,)

    # ---- Operand dtype: bf16 MXU inputs, f32 biases / accum / epilogue ------
    x_mm = x.astype(matmul_dtype)
    w1_mm = w1_p.astype(matmul_dtype)
    wh_mm = w_heads.astype(matmul_dtype)
    b1_f32 = b1_p.astype(jnp.float32)
    bh_f32 = b_heads.astype(jnp.float32)

    grid_spec = pltpu.PrefetchScalarGridSpec(
        num_scalar_prefetch=0,
        grid=grid,
        in_specs=[
            pl.BlockSpec((tb, in_feats), lambda i: (i, 0)),    # x: streamed
            pl.BlockSpec((in_feats, h_pad), lambda i: (0, 0)),  # w1: resident
            pl.BlockSpec((1, h_pad), lambda i: (0, 0)),         # b1: resident
            pl.BlockSpec((h_pad, out_w), lambda i: (0, 0)),     # fused heads W
            pl.BlockSpec((1, out_w), lambda i: (0, 0)),         # fused heads b
        ],
        out_specs=pl.BlockSpec((tb, out_w), lambda i: (i, 0)),
    )

    itemsize = jnp.dtype(matmul_dtype).itemsize
    cost = pl.CostEstimate(
        flops=2 * b_pad * (in_feats * h_pad + h_pad * out_w),
        transcendentals=0,
        bytes_accessed=(
            b_pad * in_feats * itemsize                  # streamed x
            + in_feats * h_pad * itemsize                # w1
            + h_pad * out_w * itemsize                   # fused head weights
            + (h_pad + out_w) * 4                        # biases (f32)
            + b_pad * out_w * jnp.dtype(out_dtype).itemsize  # output writeback
        ),
    )

    out = pl.pallas_call(
        encoder_kernel,
        out_shape=jax.ShapeDtypeStruct((b_pad, out_w), out_dtype),
        grid_spec=grid_spec,
        compiler_params=pltpu.CompilerParams(
            dimension_semantics=("parallel",),   # batch blocks are independent
        ),
        cost_estimate=cost,
    )(x_mm, w1_mm, b1_f32, wh_mm, bh_f32)

    # Free slices outside the kernel: drop batch padding + split fused output.
    mean = out[:B, :L]
    log_var = out[:B, L:two_l]
    return mean, log_var


def init_linear_params(key, in_features, out_features):
    """Deterministic init mimicking nn.Linear (uniform(-1/sqrt(in), 1/sqrt(in))).
    Weight is returned already transposed to (in_features, out_features)."""
    kw, kb = jax.random.split(key)
    bound = 1.0 / jnp.sqrt(jnp.float32(in_features))
    w = jax.random.uniform(kw, (in_features, out_features), jnp.float32,
                           minval=-bound, maxval=bound)
    b = jax.random.uniform(kb, (1, out_features), jnp.float32,
                           minval=-bound, maxval=bound)
    return w, b


if __name__ == "__main__":
    # Small shapes consistent with the module's forward:
    #   x: (batch, input_dim + n_classes)
    input_dim, n_classes = 32, 8
    hidden_dim, latent_dim = 64, 16
    batch = 24                        # exercises batch-pad + a 2-step grid
    in_feats = input_dim + n_classes

    key = jax.random.PRNGKey(0)
    kx, k1, k2, k3 = jax.random.split(key, 4)

    x = jax.random.normal(kx, (batch, in_feats), jnp.float32)
    w1, b1 = init_linear_params(k1, in_feats, hidden_dim)
    wmu, bmu = init_linear_params(k2, hidden_dim, latent_dim)
    wvar, bvar = init_linear_params(k3, hidden_dim, latent_dim)

    mean, log_var = encoder_forward(x, w1, b1, wmu, bmu, wvar, bvar)
    jax.block_until_ready((mean, log_var))
    assert mean.shape == (batch, latent_dim)
    assert log_var.shape == (batch, latent_dim)

    # (1) Exact-path check: emulate the kernel's bf16 operand rounding in JAX.
    xb = x.astype(jnp.bfloat16)
    w1b = w1.astype(jnp.bfloat16)
    h_bf = jnp.maximum(
        jnp.dot(xb, w1b, preferred_element_type=jnp.float32) + b1, 0.0)
    hb = h_bf.astype(jnp.bfloat16)
    mean_bf = jnp.dot(hb, wmu.astype(jnp.bfloat16),
                      preferred_element_type=jnp.float32) + bmu
    logvar_bf = jnp.dot(hb, wvar.astype(jnp.bfloat16),
                        preferred_element_type=jnp.float32) + bvar
    assert jnp.allclose(mean, mean_bf, atol=1e-4, rtol=1e-4)
    assert jnp.allclose(log_var, logvar_bf, atol=1e-4, rtol=1e-4)

    # (2) Semantic check vs the pure-f32 PyTorch-equivalent forward
    #     (loose tolerance: bf16 MXU operands).
    h_ref = jnp.maximum(x @ w1 + b1, 0.0)
    mean_ref = h_ref @ wmu + bmu
    logvar_ref = h_ref @ wvar + bvar
    assert jnp.allclose(mean, mean_ref, atol=2e-2, rtol=2e-2)
    assert jnp.allclose(log_var, logvar_ref, atol=2e-2, rtol=2e-2)

    print("KERNEL_OK")
</pallas_src>

<mosaic_0001>
module attributes {stable_mosaic.version = 11 : i64} {
  func.func @encoder_kernel(%arg0: i32, %arg1: memref<16x40xbf16, #tpu.memory_space<vmem>>, %arg2: memref<40x128xbf16, #tpu.memory_space<vmem>>, %arg3: memref<1x128xf32, #tpu.memory_space<vmem>>, %arg4: memref<128x128xbf16, #tpu.memory_space<vmem>>, %arg5: memref<1x128xf32, #tpu.memory_space<vmem>>, %arg6: memref<16x128xf32, #tpu.memory_space<vmem>>) attributes {dimension_semantics = [#tpu.dimension_semantics<parallel>], iteration_bounds = array<i64: 2>, scalar_prefetch = 0 : i64, scratch_operands = 0 : i64, tpu.core_type = #tpu.core_type<tc>, window_params = [{transform_indices = @transform_0, window_bounds = array<i64: 16, 40>}, {pipeline_mode = #tpu.pipeline_mode<synchronous>, transform_indices = @transform_1, window_bounds = array<i64: 40, 128>}, {pipeline_mode = #tpu.pipeline_mode<synchronous>, transform_indices = @transform_2, window_bounds = array<i64: 1, 128>}, {pipeline_mode = #tpu.pipeline_mode<synchronous>, transform_indices = @transform_3, window_bounds = array<i64: 128, 128>}, {pipeline_mode = #tpu.pipeline_mode<synchronous>, transform_indices = @transform_4, window_bounds = array<i64: 1, 128>}, {transform_indices = @transform_5, window_bounds = array<i64: 16, 128>}]} {
    %c0 = arith.constant 0 : index
    %c0_0 = arith.constant 0 : index
    %0 = vector.load %arg1[%c0, %c0_0] : memref<16x40xbf16, #tpu.memory_space<vmem>>, vector<16x40xbf16>
    %c0_1 = arith.constant 0 : index
    %c0_2 = arith.constant 0 : index
    %1 = vector.load %arg2[%c0_1, %c0_2] : memref<40x128xbf16, #tpu.memory_space<vmem>>, vector<40x128xbf16>
    %cst = arith.constant dense<0.000000e+00> : vector<16x128xf32>
    %2 = tpu.matmul %0, %1, %cst {dimension_numbers = #tpu.dot_dimension_numbers<[1], [0], [0], [1], [0, 0, 1, 1], [], []>} : vector<16x40xbf16>, vector<40x128xbf16>, vector<16x128xf32> -> vector<16x128xf32>
    %c0_3 = arith.constant 0 : index
    %c0_4 = arith.constant 0 : index
    %3 = vector.load %arg3[%c0_3, %c0_4] : memref<1x128xf32, #tpu.memory_space<vmem>>, vector<1x128xf32>
    %4 = vector.broadcast %3 : vector<1x128xf32> to vector<16x128xf32>
    %5 = arith.addf %2, %4 : vector<16x128xf32>
    %cst_5 = arith.constant 0.000000e+00 : f32
    %6 = vector.broadcast %cst_5 : f32 to vector<16x128xf32>
    %7 = arith.maximumf %5, %6 : vector<16x128xf32>
    %8 = arith.truncf %7 : vector<16x128xf32> to vector<16x128xbf16>
    %c0_6 = arith.constant 0 : index
    %c0_7 = arith.constant 0 : index
    %9 = vector.load %arg4[%c0_6, %c0_7] : memref<128x128xbf16, #tpu.memory_space<vmem>>, vector<128x128xbf16>
    %cst_8 = arith.constant dense<0.000000e+00> : vector<16x128xf32>
    %10 = tpu.matmul %8, %9, %cst_8 {dimension_numbers = #tpu.dot_dimension_numbers<[1], [0], [0], [1], [0, 0, 1, 1], [], []>} : vector<16x128xbf16>, vector<128x128xbf16>, vector<16x128xf32> -> vector<16x128xf32>
    %c0_9 = arith.constant 0 : index
    %c0_10 = arith.constant 0 : index
    %11 = vector.load %arg5[%c0_9, %c0_10] : memref<1x128xf32, #tpu.memory_space<vmem>>, vector<1x128xf32>
    %12 = vector.broadcast %11 : vector<1x128xf32> to vector<16x128xf32>
    %13 = arith.addf %10, %12 : vector<16x128xf32>
    %c0_11 = arith.constant 0 : index
    %c0_12 = arith.constant 0 : index
    %14 = vector.load %arg6[%c0_11, %c0_12] : memref<16x128xf32, #tpu.memory_space<vmem>>, vector<16x128xf32>
    tpu.vector_store %arg6[%c0_11, %c0_12], %13 {strides = array<i32>} : memref<16x128xf32, #tpu.memory_space<vmem>>, vector<16x128xf32>,
    return
  }
  func.func @transform_0(%arg0: i32) -> (i32, i32) {
    %c0_i32 = arith.constant 0 : i32
    %c0_i32_0 = arith.constant 0 : i32
    return %arg0, %c0_i32 : i32, i32
  }
  func.func @transform_1(%arg0: i32) -> (i32, i32) {
    %c0_i32 = arith.constant 0 : i32
    %c0_i32_0 = arith.constant 0 : i32
    %c0_i32_1 = arith.constant 0 : i32
    return %c0_i32, %c0_i32_0 : i32, i32
  }
  func.func @transform_2(%arg0: i32) -> (i32, i32) {
    %c0_i32 = arith.constant 0 : i32
    %c0_i32_0 = arith.constant 0 : i32
    %c0_i32_1 = arith.constant 0 : i32
    return %c0_i32, %c0_i32_0 : i32, i32
  }
  func.func @transform_3(%arg0: i32) -> (i32, i32) {
    %c0_i32 = arith.constant 0 : i32
    %c0_i32_0 = arith.constant 0 : i32
    %c0_i32_1 = arith.constant 0 : i32
    return %c0_i32, %c0_i32_0 : i32, i32
  }
  func.func @transform_4(%arg0: i32) -> (i32, i32) {
    %c0_i32 = arith.constant 0 : i32
    %c0_i32_0 = arith.constant 0 : i32
    %c0_i32_1 = arith.constant 0 : i32
    return %c0_i32, %c0_i32_0 : i32, i32
  }
  func.func @transform_5(%arg0: i32) -> (i32, i32) {
    %c0_i32 = arith.constant 0 : i32
    %c0_i32_0 = arith.constant 0 : i32
    return %arg0, %c0_i32 : i32, i32
  }
}

</mosaic_0001>

<llo_original>
// kernel: tpu_custom_call.1
$region0: #{tpu_custom_call.1}
  #allocation0 [shape = 'u32[]', space=smem, size = 0x4, offset = 0x4, fixed_abs, tag = 'smem constant byte address 0x4 - core index']
  #allocation1 [shape = 'u32[144,128]{1,0:T(1,128)}', space=vmem, size = 0x12000, scoped, tag = 'internal scratch']
  %s0 = inlined_call_operand.hbm [shape: bf16[32,40], index: 0, kind: input, shape index: {}]
  %s1 = inlined_call_operand.hbm [shape: bf16[40,128], index: 1, kind: input, shape index: {}]
  %s2 = inlined_call_operand.vmem [shape: f32[1,128], index: 2, kind: input, shape index: {}]
  %s3 = inlined_call_operand.hbm [shape: bf16[128,128], index: 3, kind: input, shape index: {}]
  %s4 = inlined_call_operand.vmem [shape: f32[1,128], index: 4, kind: input, shape index: {}]
  %s5 = inlined_call_operand.hbm [shape: f32[32,128], index: 5, kind: output, shape index: {}]
  %s6 = sld [smem:[#allocation0]]
  $region65: #{tpu_custom_call.1} parent=0
    _
  %s8 = ssub.s32 1, %s6
  %s9 = scalar_select 0, %s8, %s6
  $region1: #{tpu_custom_call.1} parent=0
    #allocation2 [shape = 'u8[8192]{0}', space=vmem, size = 0x2000, scoped, tag = 'input window, operand 0']
    #allocation3 [shape = 's32[2]{0}', space=sflag, size = 0x8, scoped, tag = 'scoped memory for tpu_custom_call.1']
    #allocation4 [shape = 's32[2]{0}', space=sflag, size = 0x8, scoped, tag = 'scoped memory for tpu_custom_call.1']
    #allocation5 [shape = 'u8[10240]{0}', space=vmem, size = 0x2800, scoped, tag = 'input window, operand 1, single buffered']
    #allocation6 [shape = 's32[1]{0}', space=sflag, size = 0x4, scoped, tag = 'scoped memory for tpu_custom_call.1']
    #allocation7 [shape = 'u8[32768]{0}', space=vmem, size = 0x8000, scoped, tag = 'input window, operand 3, single buffered']
    #allocation8 [shape = 'u8[16384]{0}', space=vmem, size = 0x4000, scoped, tag = 'output window, operand 0']
    %10 = vsyncpa [#allocation3], 0
    %s11 = scalar_lea.sflag [#allocation3], 1
    %12 = vsyncpa %s11, 0
    %13 = vsyncpa [#allocation6], 0
    %14 = vsyncpa [#allocation4], 0
    %s15 = scalar_lea.sflag [#allocation4], 1
    %16 = vsyncpa %s15, 0
    loop: start=0, step=1, limit=4
    $region2: #{tpu_custom_call.1} parent=1 // loop_pre_header
      _
    $region3: #{tpu_custom_call.1} parent=1 // loop_header
      %s18 = sphi 0, %s22
      %p19 = scmp.ge.s32.totalorder %s18, 4
      %s28 = sphi 0, %s30
      %s31 = sphi 0, %s28
      %s32 = sphi 0, %s31
      %s48 = sphi 0, %s32
      %s52 = sphi 0, %s52
      %s54 = sphi 0, %s52
      %s55 = sphi 0, %s54
      %s69 = sphi 0, %s55
      %s73 = sphi 0, %s73
      %s75 = sphi 0, %s73
      %s76 = sphi 0, %s75
      %s90 = sphi 0, %s76
      %s94 = sphi 0, %s94
      %s96 = sphi 0, %s94
      %s97 = sphi 0, %s96
      %s111 = sphi 0, %s97
      %s115 = sphi 0, %s115
      %s117 = sphi 0, %s115
      %s118 = sphi 0, %s117
      %s132 = sphi 0, %s118
      %s138 = sphi 0, %s140
      %s141 = sphi 0, %s138
      %s142 = sphi 0, %s141
      %s158 = sphi 0, %s142
    $region4: #{tpu_custom_call.1} parent=1 // loop_header_branch
      %21 = sbr.rel (%p19) target = $region8
    $region5: #{tpu_custom_call.1} parent=1 // loop_body
      %s23 = ssub.s32 %s18, 1
      %s24 = ssub.s32 %s18, 2
      %s25 = sadd.s32 %s18, 1
      %s26 = ssub.s32 %s18, %s25
      %p27 = scmp.eq.s32.totalorder %s26, 0
      %s29 = sadd.s32 %s28, 1
      %s30 = scalar_select %p27, %s28, %s29
      %p33 = pneg %p27
      %p34 = scmp.eq.s32.totalorder %s18, 1
      %p35 = por %p33, %p34
      %p36 = scmp.ne.s32.totalorder %s28, %s31
      %p37 = scmp.eq.s32.totalorder %s18, 0
      %p38 = por %p36, %p37
      %p39 = scmp.ne.s32.totalorder %s28, %s31
      %p40 = scmp.eq.s32.totalorder %s23, 1
      %p41 = por %p39, %p40
      %p42 = scmp.ne.s32.totalorder %s31, %s32
      %p43 = scmp.eq.s32.totalorder %s23, 0
      %p44 = por %p42, %p43
      %p45 = scmp.ne.s32.totalorder %s31, %s32
      %p46 = scmp.eq.s32.totalorder %s24, 1
      %p47 = por %p45, %p46
      %p49 = scmp.ne.s32.totalorder %s32, %s48
      %p50 = scmp.eq.s32.totalorder %s24, 0
      %p51 = por %p49, %p50
      %s53 = sadd.s32 %s52, 1
      %p56 = scmp.eq.s32.totalorder %s18, 1
      %p57 = scmp.ne.s32.totalorder %s52, %s54
      %p58 = scmp.eq.s32.totalorder %s18, 0
      %p59 = por %p57, %p58
      %p60 = scmp.ne.s32.totalorder %s52, %s54
      %p61 = scmp.eq.s32.totalorder %s23, 1
      %p62 = por %p60, %p61
      %p63 = scmp.ne.s32.totalorder %s54, %s55
      %p64 = scmp.eq.s32.totalorder %s23, 0
      %p65 = por %p63, %p64
      %p66 = scmp.ne.s32.totalorder %s54, %s55
      %p67 = scmp.eq.s32.totalorder %s24, 1
      %p68 = por %p66, %p67
      %p70 = scmp.ne.s32.totalorder %s55, %s69
      %p71 = scmp.eq.s32.totalorder %s24, 0
      %p72 = por %p70, %p71
      %s74 = sadd.s32 %s73, 1
      %p77 = scmp.eq.s32.totalorder %s18, 1
      %p78 = scmp.ne.s32.totalorder %s73, %s75
      %p79 = scmp.eq.s32.totalorder %s18, 0
      %p80 = por %p78, %p79
      %p81 = scmp.ne.s32.totalorder %s73, %s75
      %p82 = scmp.eq.s32.totalorder %s23, 1
      %p83 = por %p81, %p82
      %p84 = scmp.ne.s32.totalorder %s75, %s76
      %p85 = scmp.eq.s32.totalorder %s23, 0
      %p86 = por %p84, %p85
      %p87 = scmp.ne.s32.totalorder %s75, %s76
      %p88 = scmp.eq.s32.totalorder %s24, 1
      %p89 = por %p87, %p88
      %p91 = scmp.ne.s32.totalorder %s76, %s90
      %p92 = scmp.eq.s32.totalorder %s24, 0
      %p93 = por %p91, %p92
      %s95 = sadd.s32 %s94, 1
      %p98 = scmp.eq.s32.totalorder %s18, 1
      %p99 = scmp.ne.s32.totalorder %s94, %s96
      %p100 = scmp.eq.s32.totalorder %s18, 0
      %p101 = por %p99, %p100
      %p102 = scmp.ne.s32.totalorder %s94, %s96
      %p103 = scmp.eq.s32.totalorder %s23, 1
      %p104 = por %p102, %p103
      %p105 = scmp.ne.s32.totalorder %s96, %s97
      %p106 = scmp.eq.s32.totalorder %s23, 0
      %p107 = por %p105, %p106
      %p108 = scmp.ne.s32.totalorder %s96, %s97
      %p109 = scmp.eq.s32.totalorder %s24, 1
      %p110 = por %p108, %p109
      %p112 = scmp.ne.s32.totalorder %s97, %s111
      %p113 = scmp.eq.s32.totalorder %s24, 0
      %p114 = por %p112, %p113
      %s116 = sadd.s32 %s115, 1
      %p119 = scmp.eq.s32.totalorder %s18, 1
      %p120 = scmp.ne.s32.totalorder %s115, %s117
      %p121 = scmp.eq.s32.totalorder %s18, 0
      %p122 = por %p120, %p121
      %p123 = scmp.ne.s32.totalorder %s115, %s117
      %p124 = scmp.eq.s32.totalorder %s23, 1
      %p125 = por %p123, %p124
      %p126 = scmp.ne.s32.totalorder %s117, %s118
      %p127 = scmp.eq.s32.totalorder %s23, 0
      %p128 = por %p126, %p127
      %p129 = scmp.ne.s32.totalorder %s117, %s118
      %p130 = scmp.eq.s32.totalorder %s24, 1
      %p131 = por %p129, %p130
      %p133 = scmp.ne.s32.totalorder %s118, %s132
      %p134 = scmp.eq.s32.totalorder %s24, 0
      %p135 = por %p133, %p134
      %s136 = ssub.s32 %s18, %s25
      %p137 = scmp.eq.s32.totalorder %s136, 0
      %s139 = sadd.s32 %s138, 1
      %s140 = scalar_select %p137, %s138, %s139
      %p143 = pneg %p137
      %p144 = scmp.eq.s32.totalorder %s18, 1
      %p145 = por %p143, %p144
      %p146 = scmp.ne.s32.totalorder %s138, %s141
      %p147 = scmp.eq.s32.totalorder %s18, 0
      %p148 = por %p146, %p147
      %p149 = scmp.ne.s32.totalorder %s138, %s141
      %p150 = scmp.eq.s32.totalorder %s23, 1
      %p151 = por %p149, %p150
      %p152 = scmp.ne.s32.totalorder %s141, %s142
      %p153 = scmp.eq.s32.totalorder %s23, 0
      %p154 = por %p152, %p153
      %p155 = scmp.ne.s32.totalorder %s141, %s142
      %p156 = scmp.eq.s32.totalorder %s24, 1
      %p157 = por %p155, %p156
      %p159 = scmp.ne.s32.totalorder %s142, %s158
      %p160 = scmp.eq.s32.totalorder %s24, 0
      %p161 = por %p159, %p160
      %p162 = scmp.le.s32.totalorder 1, %s18
      %p163 = scmp.lt.s32.totalorder %s18, 3
      %p164 = pnand %p162, %p163
      %p165 = pneg %p164
      // Predicated region
      $region9: #{tpu_custom_call.1} parent=5 // pred_check
        _
      $region10: #{tpu_custom_call.1} parent=5 // pred_check_branch
        %167 = sbr.rel (%p164) target = $region12
      $region11: #{tpu_custom_call.1} parent=5 // pred_region
        %s168 = ssub.s32 %s18, 1
        // Predicated region
        $region13: #{tpu_custom_call.1} parent=11 // pred_check
          %p169 = pneg %p65
        $region14: #{tpu_custom_call.1} parent=11 // pred_check_branch
          %171 = sbr.rel (%p169) target = $region16
        $region15: #{tpu_custom_call.1} parent=11 // pred_region
          %s173 = ssub.s32 320, 320
          %174 = vsyncadd [#allocation6], %s173
          %s175 = sshll.u32 [#allocation5], 4
          %s176 = int_to_ptr.vmem [resolvable:$true] %s175
          %181 = dma.hbm_to_vmem [thread:$0]  %s1, 320, %s176, [#allocation6], 64, 64, 4
        $region16: #{tpu_custom_call.1} parent=11 // pred_fallthru
          _
        // Predicated region
        $region17: #{tpu_custom_call.1} parent=11 // pred_check
          %p182 = pneg %p86
        $region18: #{tpu_custom_call.1} parent=11 // pred_check_branch
          %184 = sbr.rel (%p182) target = $region20
        $region19: #{tpu_custom_call.1} parent=11 // pred_region
          _
        $region20: #{tpu_custom_call.1} parent=11 // pred_fallthru
          _
        // Predicated region
        $region21: #{tpu_custom_call.1} parent=11 // pred_check
          %p185 = pneg %p107
        $region22: #{tpu_custom_call.1} parent=11 // pred_check_branch
          %187 = sbr.rel (%p185) target = $region24
        $region23: #{tpu_custom_call.1} parent=11 // pred_region
          %s189 = ssub.s32 1024, 1024
          %190 = vsyncadd [#allocation6], %s189
          %s191 = sshll.u32 [#allocation7], 4
          %s192 = int_to_ptr.vmem [resolvable:$true] %s191
          %197 = dma.hbm_to_vmem [thread:$0]  %s3, 1024, %s192, [#allocation6], 64, 64, 4
        $region24: #{tpu_custom_call.1} parent=11 // pred_fallthru
          _
        // Predicated region
        $region25: #{tpu_custom_call.1} parent=11 // pred_check
          %p198 = pneg %p128
        $region26: #{tpu_custom_call.1} parent=11 // pred_check_branch
          %200 = sbr.rel (%p198) target = $region28
        $region27: #{tpu_custom_call.1} parent=11 // pred_region
          _
        $region28: #{tpu_custom_call.1} parent=11 // pred_fallthru
          _
      $region12: #{tpu_custom_call.1} parent=5 // pred_fallthru
        _
      %p201 = scmp.lt.s32.totalorder %s18, 2
      // Predicated region
      $region29: #{tpu_custom_call.1} parent=5 // pred_check
        %p202 = pneg %p201
      $region30: #{tpu_custom_call.1} parent=5 // pred_check_branch
        %204 = sbr.rel (%p202) target = $region32
      $region31: #{tpu_custom_call.1} parent=5 // pred_region
        // Predicated region
        $region33: #{tpu_custom_call.1} parent=31 // pred_check
          %p205 = pneg %p38
        $region34: #{tpu_custom_call.1} parent=31 // pred_check_branch
          %207 = sbr.rel (%p205) target = $region36
        $region35: #{tpu_custom_call.1} parent=31 // pred_region
          %s208 = sand.u32 %s28, 1
          %s209 = scalar_lea.sflag [#allocation3], %s208
          %s210 = sand.u32 %s28, 1
          %s211 = smul.addr %s210, 8
          %s212 = scalar_lea.vmem [#allocation2], %s211
          %s213 = smul.u32 2, %s18
          %s215 = ssub.s32 128, 128
          %216 = vsyncadd %s209, %s215
          %s217 = smul.addr %s213, 64
          %s218 = scalar_lea.hbm %s0, %s217
          %s219 = sshll.u32 %s212, 4
          %s220 = int_to_ptr.vmem [resolvable:$true] %s219
          %225 = dma.hbm_to_vmem [thread:$0]  %s218, 128, %s220, %s209, 64, 64, 4
        $region36: #{tpu_custom_call.1} parent=31 // pred_fallthru
          _
      $region32: #{tpu_custom_call.1} parent=5 // pred_fallthru
        _
      %p226 = scmp.le.s32.totalorder 1, %s18
      %p227 = scmp.lt.s32.totalorder %s18, 3
      %p228 = pnand %p226, %p227
      %p229 = pneg %p228
      // Predicated region
      $region37: #{tpu_custom_call.1} parent=5 // pred_check
        _
      $region38: #{tpu_custom_call.1} parent=5 // pred_check_branch
        %231 = sbr.rel (%p228) target = $region40
      $region39: #{tpu_custom_call.1} parent=5 // pred_region
        %s232 = ssub.s32 %s18, 1
        %s233 = sand.u32 %s31, 1
        %s234 = scalar_lea.sflag [#allocation3], %s233
        %s235 = sand.u32 %s31, 1
        %s236 = smul.addr %s235, 8
        %s237 = scalar_lea.vmem [#allocation2], %s236
        // Predicated region
        $region41: #{tpu_custom_call.1} parent=39 // pred_check
          %p238 = pneg %p44
        $region42: #{tpu_custom_call.1} parent=39 // pred_check_branch
          %240 = sbr.rel (%p238) target = $region44
        $region43: #{tpu_custom_call.1} parent=39 // pred_region
          %241 = dma.done %s234, 128
        $region44: #{tpu_custom_call.1} parent=39 // pred_fallthru
          _
        // Predicated region
        $region45: #{tpu_custom_call.1} parent=39 // pred_check
          %p242 = pneg %p65
        $region46: #{tpu_custom_call.1} parent=39 // pred_check_branch
          %244 = sbr.rel (%p242) target = $region48
        $region47: #{tpu_custom_call.1} parent=39 // pred_region
          %245 = dma.done [#allocation6], 320
        $region48: #{tpu_custom_call.1} parent=39 // pred_fallthru
          _
        // Predicated region
        $region49: #{tpu_custom_call.1} parent=39 // pred_check
          %p246 = pneg %p107
        $region50: #{tpu_custom_call.1} parent=39 // pred_check_branch
          %248 = sbr.rel (%p246) target = $region52
        $region51: #{tpu_custom_call.1} parent=39 // pred_region
          %249 = dma.done [#allocation6], 1024
        $region52: #{tpu_custom_call.1} parent=39 // pred_fallthru
          _
        %s250 = sand.u32 %s31, 1
        %s251 = scalar_lea.sflag [#allocation3], %s250
        %s252 = sand.u32 %s31, 1
        %s253 = smul.addr %s252, 8
        %s254 = scalar_lea.vmem [#allocation2], %s253
        %p255 = pneg %p44
        %p256 = pneg %p41
        %p257 = pneg %p65
        %p258 = pneg %p62
        %p259 = pneg %p86
        %p260 = pneg %p83
        %p261 = pneg %p107
        %p262 = pneg %p104
        %p263 = pneg %p128
        %p264 = pneg %p125
        %p265 = pneg %p154
        %p266 = pneg %p151
        %s267 = sand.u32 %s141, 1
        %s268 = scalar_lea.sflag [#allocation4], %s267
        %s269 = sand.u32 %s141, 1
        %s270 = smul.addr %s269, 16
        %s271 = scalar_lea.vmem [#allocation8], %s270
        %s272 = smul.u32 2, %s23
        %s273 = smul.u32 2, %s23
        %v275 = vld [vmem:[%s237] sm:$0xf]
        %v276 = vld [vmem:[%s237 + $0x4] sm:$0xf]
        %v277 = vld [vmem:[#allocation5] sm:$0xf]
        %v278 = vld [vmem:[#allocation5 + $0x4] sm:$0xf]
        %v279 = vld [vmem:[#allocation5 + $0x8] sm:$0xf]
        %v280 = vld [vmem:[#allocation5 + $0xc] sm:$0xf]
        %v281 = vld [vmem:[#allocation5 + $0x10] sm:$0xf]
        %v282 = vld [vmem:[%s2] sm:$0x1]
        %v284 = vlaneseq
        %v285 = vshrl.u32 %v284, 7
        %v286 = vsub.s32 0, %v285
        %v287 = vrot.slane %v282, %v286
        %v291 = vunpack.c.l.b16 %v275
        %v292 = vunpack.c.l.b16 %v276
        %v293 = vpack.c.b16 %v292, %v291
        %v299 = vunpack.c.l.b16 %v277
        %v300 = vunpack.c.l.b16 %v278
        %v301 = vunpack.c.l.b16 %v279
        %v302 = vunpack.c.l.b16 %v280
        %v303 = vunpack.c.l.b16 %v281
        %v304 = vpack.c.b16 %v300, %v299
        %v305 = vpack.c.b16 %v302, %v301
        %v306 = vpack.c.b16 %v303, %v303
        %vm309 = vcmask 326656
        %v311 = vsel %vm309, %v293, 0
        %vm313 = vcmask 1043456
        %v315 = vsel %vm313, %v306, 0
        %317 = vmatprep.subr.bf16.mxu0 0
        %318 = vmatpush1.bf16.msra.mxu0 %v304
        %319 = vmatprep.subr.bf16.mxu0 0
        %320 = vmatpush1.bf16.msra.mxu0 %v305
        %321 = vmatprep.subr.bf16.mxu0 0
        %322 = vmatpush1.bf16.msra.mxu0 %v315
        %323 = vmatprep.subr.bf16.mxu0 0
        %324 = vmatpush1.bf16.msra.mxu0 0
        %325 = vmatprep.subr.bf16.mxu0 0
        %326 = vmatpush1.bf16.msra.mxu0 0
        %327 = vmatprep.subr.bf16.mxu0 0
        %328 = vmatpush1.bf16.msra.mxu0 0
        %329 = vmatprep.subr.bf16.mxu0 0
        %330 = vmatpush1.bf16.msra.mxu0 0
        %331 = vmatprep.subr.bf16.mxu0 0
        %332 = vmatpush1.bf16.msra.mxu0 0
        %333 = vmatprep.subr.bf16.mxu0 0
        %334 = vmatpush1.bf16.msra.mxu0 0
        %335 = vmatprep.subr.bf16.mxu0 0
        %336 = vmatpush1.bf16.msra.mxu0 0
        %337 = vmatprep.subr.bf16.mxu0 0
        %338 = vmatpush1.bf16.msra.mxu0 0
        %339 = vmatprep.subr.bf16.mxu0 0
        %340 = vmatpush1.bf16.msra.mxu0 0
        %341 = vmatprep.subr.bf16.mxu0 0
        %342 = vmatpush1.bf16.msra.mxu0 0
        %343 = vmatprep.subr.bf16.mxu0 0
        %344 = vmatpush1.bf16.msra.mxu0 0
        %345 = vmatprep.subr.bf16.mxu0 0
        %346 = vmatpush1.bf16.msra.mxu0 0
        %347 = vmatprep.subr.bf16.mxu0 0
        %348 = vmatpush1.bf16.msra.mxu0 0
        %349 = vmatprep.mubr.bf16.mxu0 0
        %350 = vmatmul.mubr.bf16.gmra.mrb[0].mxu0 %v311
        %v351 = vpop.f32.mrb[0].mxu0
        %v352 = vadd.f32 %v287, %v351
        %v353 = vpop.f32.mrb[0].mxu0
        %v354 = vpop.f32.mrb[0].mxu0
        %v355 = vadd.f32 %v287, %v354
        %v356 = vpop.f32.mrb[0].mxu0
        %357 = vdwg.mxu0
        %v358 = vmax.f32 %v352, 0.0
        %v359 = vmax.f32 %v355, 0.0
        %v360 = vpack.c.bf16 %v359, %v358
        %v361 = vld [vmem:[#allocation7] sm:$0xf]
        %v362 = vld [vmem:[#allocation7 + $0x4] sm:$0xf]
        %v363 = vld [vmem:[#allocation7 + $0x8] sm:$0xf]
        %v364 = vld [vmem:[#allocation7 + $0xc] sm:$0xf]
        %v365 = vld [vmem:[#allocation7 + $0x10] sm:$0xf]
        %v366 = vld [vmem:[#allocation7 + $0x14] sm:$0xf]
        %v367 = vld [vmem:[#allocation7 + $0x18] sm:$0xf]
        %v368 = vld [vmem:[#allocation7 + $0x1c] sm:$0xf]
        %v369 = vld [vmem:[#allocation7 + $0x20] sm:$0xf]
        %v370 = vld [vmem:[#allocation7 + $0x24] sm:$0xf]
        %v371 = vld [vmem:[#allocation7 + $0x28] sm:$0xf]
        %v372 = vld [vmem:[#allocation7 + $0x2c] sm:$0xf]
        %v373 = vld [vmem:[#allocation7 + $0x30] sm:$0xf]
        %v374 = vld [vmem:[#allocation7 + $0x34] sm:$0xf]
        %v375 = vld [vmem:[#allocation7 + $0x38] sm:$0xf]
        %v376 = vld [vmem:[#allocation7 + $0x3c] sm:$0xf]
        %v377 = vld [vmem:[%s4] sm:$0x1]
        %v379 = vlaneseq
        %v380 = vshrl.u32 %v379, 7
        %v381 = vsub.s32 0, %v380
        %v382 = vrot.slane %v377, %v381
        %v400 = vunpack.c.l.b16 %v361
        %v401 = vunpack.c.l.b16 %v362
        %v402 = vunpack.c.l.b16 %v363
        %v403 = vunpack.c.l.b16 %v364
        %v404 = vunpack.c.l.b16 %v365
        %v405 = vunpack.c.l.b16 %v366
        %v406 = vunpack.c.l.b16 %v367
        %v407 = vunpack.c.l.b16 %v368
        %v408 = vunpack.c.l.b16 %v369
        %v409 = vunpack.c.l.b16 %v370
        %v410 = vunpack.c.l.b16 %v371
        %v411 = vunpack.c.l.b16 %v372
        %v412 = vunpack.c.l.b16 %v373
        %v413 = vunpack.c.l.b16 %v374
        %v414 = vunpack.c.l.b16 %v375
        %v415 = vunpack.c.l.b16 %v376
        %v416 = vpack.c.b16 %v401, %v400
        %v417 = vpack.c.b16 %v403, %v402
        %v418 = vpack.c.b16 %v405, %v404
        %v419 = vpack.c.b16 %v407, %v406
        %v420 = vpack.c.b16 %v409, %v408
        %v421 = vpack.c.b16 %v411, %v410
        %v422 = vpack.c.b16 %v413, %v412
        %v423 = vpack.c.b16 %v415, %v414
        %432 = vmatprep.subr.bf16.mxu0 0
        %433 = vmatpush1.bf16.msra.mxu0 %v416
        %434 = vmatprep.subr.bf16.mxu0 0
        %435 = vmatpush1.bf16.msra.mxu0 %v417
        %436 = vmatprep.subr.bf16.mxu0 0
        %437 = vmatpush1.bf16.msra.mxu0 %v418
        %438 = vmatprep.subr.bf16.mxu0 0
        %439 = vmatpush1.bf16.msra.mxu0 %v419
        %440 = vmatprep.subr.bf16.mxu0 0
        %441 = vmatpush1.bf16.msra.mxu0 %v420
        %442 = vmatprep.subr.bf16.mxu0 0
        %443 = vmatpush1.bf16.msra.mxu0 %v421
        %444 = vmatprep.subr.bf16.mxu0 0
        %445 = vmatpush1.bf16.msra.mxu0 %v422
        %446 = vmatprep.subr.bf16.mxu0 0
        %447 = vmatpush1.bf16.msra.mxu0 %v423
        %448 = vmatprep.subr.bf16.mxu0 0
        %449 = vmatpush1.bf16.msra.mxu0 0
        %450 = vmatprep.subr.bf16.mxu0 0
        %451 = vmatpush1.bf16.msra.mxu0 0
        %452 = vmatprep.subr.bf16.mxu0 0
        %453 = vmatpush1.bf16.msra.mxu0 0
        %454 = vmatprep.subr.bf16.mxu0 0
        %455 = vmatpush1.bf16.msra.mxu0 0
        %456 = vmatprep.subr.bf16.mxu0 0
        %457 = vmatpush1.bf16.msra.mxu0 0
        %458 = vmatprep.subr.bf16.mxu0 0
        %459 = vmatpush1.bf16.msra.mxu0 0
        %460 = vmatprep.subr.bf16.mxu0 0
        %461 = vmatpush1.bf16.msra.mxu0 0
        %462 = vmatprep.subr.bf16.mxu0 0
        %463 = vmatpush1.bf16.msra.mxu0 0
        %464 = vmatprep.mubr.bf16.mxu0 0
        %465 = vmatmul.mubr.bf16.gmra.mrb[0].mxu0 %v360
        %v466 = vpop.f32.mrb[0].mxu0
        %v467 = vadd.f32 %v382, %v466
        %v468 = vpop.f32.mrb[0].mxu0
        %v469 = vpop.f32.mrb[0].mxu0
        %v470 = vadd.f32 %v382, %v469
        %v471 = vpop.f32.mrb[0].mxu0
        %472 = vdwg.mxu0
        %473 = vst [vmem:[%s271] sm:$0xff] %v467
        %474 = vst [vmem:[%s271 + $0x8] sm:$0xff] %v470
        %s475 = sand.u32 %s141, 1
        %s476 = scalar_lea.sflag [#allocation4], %s475
        %s477 = sand.u32 %s141, 1
        %s478 = smul.addr %s477, 16
        %s479 = scalar_lea.vmem [#allocation8], %s478
        // Predicated region
        $region53: #{tpu_custom_call.1} parent=39 // pred_check
          %p480 = pneg %p151
        $region54: #{tpu_custom_call.1} parent=39 // pred_check_branch
          %482 = sbr.rel (%p480) target = $region56
        $region55: #{tpu_custom_call.1} parent=39 // pred_region
          %s483 = smul.u32 2, %s23
          %s485 = ssub.s32 256, 256
          %486 = vsyncadd %s476, %s485
          %s487 = smul.addr %s483, 128
          %s488 = scalar_lea.hbm %s5, %s487
          %s489 = sshll.u32 %s479, 4
          %s490 = int_to_ptr.vmem [resolvable:$true] %s489
          %495 = dma.vmem_to_hbm [thread:$0]  %s490, 256, %s488, %s476, 128, 128, 8
        $region56: #{tpu_custom_call.1} parent=39 // pred_fallthru
          _
      $region40: #{tpu_custom_call.1} parent=5 // pred_fallthru
        _
      %p496 = scmp.le.s32.totalorder 2, %s18
      // Predicated region
      $region57: #{tpu_custom_call.1} parent=5 // pred_check
        %p497 = pneg %p496
      $region58: #{tpu_custom_call.1} parent=5 // pred_check_branch
        %499 = sbr.rel (%p497) target = $region60
      $region59: #{tpu_custom_call.1} parent=5 // pred_region
        %s500 = ssub.s32 %s18, 2
        // Predicated region
        $region61: #{tpu_custom_call.1} parent=59 // pred_check
          %p501 = pneg %p157
        $region62: #{tpu_custom_call.1} parent=59 // pred_check_branch
          %503 = sbr.rel (%p501) target = $region64
        $region63: #{tpu_custom_call.1} parent=59 // pred_region
          %s504 = sand.u32 %s142, 1
          %s505 = scalar_lea.sflag [#allocation4], %s504
          %s506 = sand.u32 %s142, 1
          %s507 = smul.addr %s506, 16
          %s508 = scalar_lea.vmem [#allocation8], %s507
          %509 = dma.done %s505, 256
        $region64: #{tpu_custom_call.1} parent=59 // pred_fallthru
          _
      $region60: #{tpu_custom_call.1} parent=5 // pred_fallthru
        _
    $region6: #{tpu_custom_call.1} parent=1 // loop_footer
      %s22 = sadd.s32 1, %s18
    $region7: #{tpu_custom_call.1} parent=1 // loop_footer_branch
      %17 = sbr.rel target = $region3
    $region8: #{tpu_custom_call.1} parent=1 // loop_exit
      _
    %510 = vsyncpa [#allocation3], 1
    %s511 = scalar_lea.sflag [#allocation3], 1
    %512 = vsyncpa %s511, 1
    %513 = vsyncpa [#allocation6], 1
    %514 = vsyncpa [#allocation4], 1
    %s515 = scalar_lea.sflag [#allocation4], 1
    %516 = vsyncpa %s515, 1

</llo_original>
